<compile_context>
chip_gen: v5e
topology: v5e:2x2
jax: 0.10.0
libtpu: 0.0.40
codegen_flags: <defaults>
</compile_context>

<pallas_src>
import functools

import jax
import jax.numpy as jnp
from jax import lax
from jax.experimental import pallas as pl
from jax.experimental.pallas import tpu as pltpu


def _round_up(x, m):
    return ((x + m - 1) // m) * m


# ----------------------------------- kernel ------------------------------------
def _predictor_kernel(z_ref, w_ref, b_ref, o_ref):
    # z: (tm, H)   activations tile
    # w: (H, tn)   weight slab, already transposed/padded in the wrapper (MXU-native)
    # b: (1, tn)   bias slab (zero-padded lanes)
    # o: (tm, tn)  lane-dense output tile
    acc = jnp.dot(z_ref[...], w_ref[...], preferred_element_type=jnp.float32)
    o_ref[...] = (acc + b_ref[...]).astype(o_ref.dtype)


# -------------------------------- tile selection --------------------------------
def _pick_tiles(B, H, Cp, bytes_per, tm_max, tn_max, vmem_budget):
    """Pick (tm, tn) so double-buffered tiles stay under `vmem_budget` bytes."""
    tn = min(tn_max, Cp)
    while True:
        fixed = 2 * (H * tn + tn) * bytes_per          # weight + bias slabs (2 bufs, worst case)
        per_row = 2 * (H + tn) * bytes_per             # double-buffered z row + out row
        avail = vmem_budget - fixed
        if avail >= 8 * per_row or tn <= 128:
            break
        tn //= 2                                        # shrink output tile before giving up
        tn = max(128, tn)
    tm = max(8, avail // per_row) if avail > 0 else 8
    tm = max(8, min(tm_max, (tm // 8) * 8))
    return int(tm), int(tn)


# ----------------------------------- wrapper ------------------------------------
def predictor_forward(z, weight, bias, *, tm_max=1024, tn_max=256,
                      vmem_budget=12 * 1024 * 1024):
    """Equivalent of PyTorch nn.Linear: z @ weight.T + bias.

    z:      (B, H)
    weight: (C, H)   -- PyTorch nn.Linear convention
    bias:   (C,)
    returns (B, C)
    """
    B, H = z.shape
    C = weight.shape[0]
    bytes_per = jnp.dtype(z.dtype).itemsize

    # --- lane-dense class dimension: pad C up to a multiple of 128 -----------------
    Cp = max(128, _round_up(C, 128))
    if Cp != C:
        weight = jnp.pad(weight, ((0, Cp - C), (0, 0)))
        bias = jnp.pad(bias, (0, Cp - C))
    w_t = weight.T                      # (H, Cp): one-time transpose, amortized over the batch
    bias2d = bias.reshape(1, Cp)

    # --- tile sizes from a VMEM byte budget (not divisibility) ---------------------
    tm, tn = _pick_tiles(B, H, Cp, bytes_per, tm_max, tn_max, vmem_budget)

    # --- batch padding so the grid divides evenly ----------------------------------
    if B <= tm:
        tm_eff, Bp = B, B               # single batch tile; block == full dim, no pad needed
    else:
        tm_eff = tm
        Bp = _round_up(B, tm)
        if Bp != B:
            z = jnp.pad(z, ((0, Bp - B), (0, 0)))

    grid = (Bp // tm_eff, Cp // tn)

    cost = pl.CostEstimate(
        flops=2 * Bp * Cp * H,
        transcendentals=0,
        bytes_accessed=int(bytes_per * (Bp * H + H * Cp + Bp * Cp + Cp)),
    )

    out_padded = pl.pallas_call(
        _predictor_kernel,
        out_shape=jax.ShapeDtypeStruct((Bp, Cp), z.dtype),
        grid=grid,
        in_specs=[
            pl.BlockSpec((tm_eff, H), lambda i, j: (i, 0)),   # streaming activations
            pl.BlockSpec((H, tn), lambda i, j: (0, j)),       # resident weight slab
            pl.BlockSpec((1, tn), lambda i, j: (0, j)),       # resident bias slab
        ],
        out_specs=pl.BlockSpec((tm_eff, tn), lambda i, j: (i, j)),
        compiler_params=pltpu.CompilerParams(
            dimension_semantics=("parallel", "parallel")),
        cost_estimate=cost,
    )(z, w_t, bias2d)

    return out_padded[:B, :C]


# ------------------------------------ main --------------------------------------
if __name__ == "__main__":
    key = jax.random.PRNGKey(0)
    k_z, k_w, k_b, k_z2, k_w2, k_b2 = jax.random.split(key, 6)

    def _reference(z, weight, bias):
        return lax.dot_general(z, weight, (((1,), (1,)), ((), ())),
                               precision=lax.Precision.HIGHEST) + bias

    # --- small shapes consistent with Predictor(num_class=16, hidden_size=32) ------
    batch, hidden_size, num_class = 8, 32, 16
    bound = 1.0 / jnp.sqrt(jnp.float32(hidden_size))
    weight = jax.random.uniform(k_w, (num_class, hidden_size), jnp.float32, -bound, bound)
    bias = jax.random.uniform(k_b, (num_class,), jnp.float32, -bound, bound)
    z = jax.random.normal(k_z, (batch, hidden_size), dtype=jnp.float32)

    out = jax.block_until_ready(predictor_forward(z, weight, bias))
    ref = _reference(z, weight, bias)
    assert out.shape == (batch, num_class)
    assert jnp.allclose(out, ref, atol=1e-2, rtol=1e-2), "small-shape mismatch vs reference"

    # --- ragged batch + padded classes + multi-tile grid (forces grid=(5,2)) -------
    B2, H2, C2 = 300, 128, 200
    bound2 = 1.0 / jnp.sqrt(jnp.float32(H2))
    weight2 = jax.random.uniform(k_w2, (C2, H2), jnp.float32, -bound2, bound2)
    bias2 = jax.random.uniform(k_b2, (C2,), jnp.float32, -bound2, bound2)
    z2 = jax.random.normal(k_z2, (B2, H2), dtype=jnp.float32)

    out2 = jax.block_until_ready(
        predictor_forward(z2, weight2, bias2, tm_max=64, tn_max=128))
    ref2 = _reference(z2, weight2, bias2)
    assert out2.shape == (B2, C2)
    assert jnp.allclose(out2, ref2, atol=2e-2, rtol=2e-2), "tiled-path mismatch vs reference"

    print("KERNEL_OK")
</pallas_src>

<mosaic_0001>
module attributes {stable_mosaic.version = 11 : i64} {
  func.func @_predictor_kernel(%arg0: i32, %arg1: i32, %arg2: memref<8x32xf32, #tpu.memory_space<vmem>>, %arg3: memref<32x128xf32, #tpu.memory_space<vmem>>, %arg4: memref<1x128xf32, #tpu.memory_space<vmem>>, %arg5: memref<8x128xf32, #tpu.memory_space<vmem>>) attributes {dimension_semantics = [#tpu.dimension_semantics<parallel>, #tpu.dimension_semantics<parallel>], iteration_bounds = array<i64: 1, 1>, scalar_prefetch = 0 : i64, scratch_operands = 0 : i64, tpu.core_type = #tpu.core_type<tc>, window_params = [{transform_indices = @transform_0, window_bounds = array<i64: 8, 32>}, {transform_indices = @transform_1, window_bounds = array<i64: 32, 128>}, {transform_indices = @transform_2, window_bounds = array<i64: 1, 128>}, {transform_indices = @transform_3, window_bounds = array<i64: 8, 128>}]} {
    %c0 = arith.constant 0 : index
    %c0_0 = arith.constant 0 : index
    %0 = vector.load %arg2[%c0, %c0_0] : memref<8x32xf32, #tpu.memory_space<vmem>>, vector<8x32xf32>
    %c0_1 = arith.constant 0 : index
    %c0_2 = arith.constant 0 : index
    %1 = vector.load %arg3[%c0_1, %c0_2] : memref<32x128xf32, #tpu.memory_space<vmem>>, vector<32x128xf32>
    %cst = arith.constant dense<0.000000e+00> : vector<8x128xf32>
    %2 = tpu.matmul %0, %1, %cst {dimension_numbers = #tpu.dot_dimension_numbers<[1], [0], [0], [1], [0, 0, 1, 1], [], []>} : vector<8x32xf32>, vector<32x128xf32>, vector<8x128xf32> -> vector<8x128xf32>
    %c0_3 = arith.constant 0 : index
    %c0_4 = arith.constant 0 : index
    %3 = vector.load %arg4[%c0_3, %c0_4] : memref<1x128xf32, #tpu.memory_space<vmem>>, vector<1x128xf32>
    %4 = vector.broadcast %3 : vector<1x128xf32> to vector<8x128xf32>
    %5 = arith.addf %2, %4 : vector<8x128xf32>
    %c0_5 = arith.constant 0 : index
    %c0_6 = arith.constant 0 : index
    %6 = vector.load %arg5[%c0_5, %c0_6] : memref<8x128xf32, #tpu.memory_space<vmem>>, vector<8x128xf32>
    tpu.vector_store %arg5[%c0_5, %c0_6], %5 {strides = array<i32>} : memref<8x128xf32, #tpu.memory_space<vmem>>, vector<8x128xf32>,
    return
  }
  func.func @transform_0(%arg0: i32, %arg1: i32) -> (i32, i32) {
    %c0_i32 = arith.constant 0 : i32
    %c0_i32_0 = arith.constant 0 : i32
    return %arg0, %c0_i32 : i32, i32
  }
  func.func @transform_1(%arg0: i32, %arg1: i32) -> (i32, i32) {
    %c0_i32 = arith.constant 0 : i32
    %c0_i32_0 = arith.constant 0 : i32
    return %c0_i32, %arg1 : i32, i32
  }
  func.func @transform_2(%arg0: i32, %arg1: i32) -> (i32, i32) {
    %c0_i32 = arith.constant 0 : i32
    %c0_i32_0 = arith.constant 0 : i32
    return %c0_i32, %arg1 : i32, i32
  }
  func.func @transform_3(%arg0: i32, %arg1: i32) -> (i32, i32) {
    %c0_i32 = arith.constant 0 : i32
    return %arg0, %arg1 : i32, i32
  }
}

</mosaic_0001>

<llo_original>
// kernel: tpu_custom_call.1
$region0: #{tpu_custom_call.1}
  #allocation0 [shape = 'u32[]', space=smem, size = 0x4, offset = 0x4, fixed_abs, tag = 'smem constant byte address 0x4 - core index']
  #allocation1 [shape = 'u32[72,128]{1,0:T(1,128)}', space=vmem, size = 0x9000, scoped, tag = 'internal scratch']
  %s0 = inlined_call_operand.hbm [shape: f32[8,32], index: 0, kind: input, shape index: {}]
  %s1 = inlined_call_operand.hbm [shape: f32[32,128], index: 1, kind: input, shape index: {}]
  %s2 = inlined_call_operand.vmem [shape: f32[1,128], index: 2, kind: input, shape index: {}]
  %s3 = inlined_call_operand.hbm [shape: f32[8,128], index: 3, kind: output, shape index: {}]
  %s4 = sld [smem:[#allocation0]]
  $region30: #{tpu_custom_call.1} parent=0
    _
  %s6 = ssub.s32 1, %s4
  %s7 = scalar_select 0, %s6, %s4
  $region1: #{tpu_custom_call.1} parent=0
    #allocation2 [shape = 'u8[4096]{0}', space=vmem, size = 0x1000, scoped, tag = 'input window, operand 0, single buffered']
    #allocation3 [shape = 's32[1]{0}', space=sflag, size = 0x4, scoped, tag = 'scoped memory for tpu_custom_call.1']
    #allocation4 [shape = 's32[1]{0}', space=sflag, size = 0x4, scoped, tag = 'scoped memory for tpu_custom_call.1']
    #allocation5 [shape = 'u8[16384]{0}', space=vmem, size = 0x4000, scoped, tag = 'input window, operand 1, single buffered']
    #allocation6 [shape = 's32[1]{0}', space=sflag, size = 0x4, scoped, tag = 'scoped memory for tpu_custom_call.1']
    #allocation7 [shape = 'u8[4096]{0}', space=vmem, size = 0x1000, scoped, tag = 'output window, operand 0, single buffered']
    %8 = vsyncpa [#allocation3], 0
    %9 = vsyncpa [#allocation6], 0
    %10 = vsyncpa [#allocation4], 0
    // Predicated region
    $region2: #{tpu_custom_call.1} parent=1 // pred_check
      _
    $region3: #{tpu_custom_call.1} parent=1 // pred_check_branch
      %12 = sbr.rel (0) target = $region5
    $region4: #{tpu_custom_call.1} parent=1 // pred_region
      %14 = vsyncadd [#allocation3], 0
      %s16 = sshll.u32 %s0, 4
      %s17 = int_to_ptr.hbm [resolvable:$true] %s16
      %s18 = sshll.u32 [#allocation2], 4
      %s19 = int_to_ptr.vmem [resolvable:$true] %s18
      %21 = dma.hbm_to_vmem [thread:$0]  %s17, 128, %s19, [#allocation3]
    $region5: #{tpu_custom_call.1} parent=1 // pred_fallthru
      _
    // Predicated region
    $region6: #{tpu_custom_call.1} parent=1 // pred_check
      _
    $region7: #{tpu_custom_call.1} parent=1 // pred_check_branch
      %23 = sbr.rel (0) target = $region9
    $region8: #{tpu_custom_call.1} parent=1 // pred_region
      %25 = vsyncadd [#allocation6], 0
      %s26 = sshll.u32 %s1, 4
      %s27 = int_to_ptr.hbm [resolvable:$true] %s26
      %s28 = sshll.u32 [#allocation5], 4
      %s29 = int_to_ptr.vmem [resolvable:$true] %s28
      %34 = dma.hbm_to_vmem [thread:$0]  %s27, 512, %s29, [#allocation6], 128, 128, 8
    $region9: #{tpu_custom_call.1} parent=1 // pred_fallthru
      _
    // Predicated region
    $region10: #{tpu_custom_call.1} parent=1 // pred_check
      _
    $region11: #{tpu_custom_call.1} parent=1 // pred_check_branch
      %36 = sbr.rel (0) target = $region13
    $region12: #{tpu_custom_call.1} parent=1 // pred_region
      _
    $region13: #{tpu_custom_call.1} parent=1 // pred_fallthru
      _
    // Predicated region
    $region14: #{tpu_custom_call.1} parent=1 // pred_check
      _
    $region15: #{tpu_custom_call.1} parent=1 // pred_check_branch
      %38 = sbr.rel (0) target = $region17
    $region16: #{tpu_custom_call.1} parent=1 // pred_region
      %40 = dma.done [#allocation3], 128
    $region17: #{tpu_custom_call.1} parent=1 // pred_fallthru
      _
    // Predicated region
    $region18: #{tpu_custom_call.1} parent=1 // pred_check
      _
    $region19: #{tpu_custom_call.1} parent=1 // pred_check_branch
      %42 = sbr.rel (0) target = $region21
    $region20: #{tpu_custom_call.1} parent=1 // pred_region
      %44 = dma.done [#allocation6], 512
    $region21: #{tpu_custom_call.1} parent=1 // pred_fallthru
      _
    %v45 = vld [vmem:[#allocation2] sm:$0xff]
    %v46 = vld [vmem:[#allocation5] sm:$0xff]
    %v47 = vld [vmem:[#allocation5 + $0x8] sm:$0xff]
    %v48 = vld [vmem:[#allocation5 + $0x10] sm:$0xff]
    %v49 = vld [vmem:[#allocation5 + $0x18] sm:$0xff]
    %v50 = vld [vmem:[%s2] sm:$0x1]
    %v52 = vperm.slane %v50, 0
    %vm54 = vcmask 261120
    %v56 = vsel %vm54, %v45, 0
    %58 = vmatpush.msra.mxu0 0.0
    %59 = vmatpush.msra.mxu0 0.0
    %60 = vmatpush.msra.mxu0 0.0
    %61 = vmatpush.msra.mxu0 0.0
    %62 = vmatpush.msra.mxu0 0.0
    %63 = vmatpush.msra.mxu0 0.0
    %64 = vmatpush.msra.mxu0 0.0
    %65 = vmatpush.msra.mxu0 0.0
    %66 = vmatpush.msra.mxu0 0.0
    %67 = vmatpush.msra.mxu0 0.0
    %68 = vmatpush.msra.mxu0 0.0
    %69 = vmatpush.msra.mxu0 0.0
    %70 = vmatpush.msra.mxu0 %v49
    %71 = vmatpush.msra.mxu0 %v48
    %72 = vmatpush.msra.mxu0 %v47
    %73 = vmatpush.msra.mxu0 %v46
    %74 = vmatmul.f32.gmra.mxu0 %v56
    %v75 = vpop.f32.mrf.mxu0
    %v76 = vadd.f32 %v52, %v75
    %77 = vdwg.mxu0
    %78 = vst [vmem:[#allocation7] sm:$0xff] %v76
    // Predicated region
    $region22: #{tpu_custom_call.1} parent=1 // pred_check
      _
    $region23: #{tpu_custom_call.1} parent=1 // pred_check_branch
      %80 = sbr.rel (0) target = $region25
    $region24: #{tpu_custom_call.1} parent=1 // pred_region
      %82 = vsyncadd [#allocation4], 0
      %s84 = sshll.u32 [#allocation7], 4
      %s85 = int_to_ptr.vmem [resolvable:$true] %s84
      %s86 = sshll.u32 %s3, 4
      %s87 = int_to_ptr.hbm [resolvable:$true] %s86
      %89 = dma.vmem_to_hbm [thread:$0]  %s85, 128, %s87, [#allocation4]
    $region25: #{tpu_custom_call.1} parent=1 // pred_fallthru
      _
    // Predicated region
    $region26: #{tpu_custom_call.1} parent=1 // pred_check
      _
    $region27: #{tpu_custom_call.1} parent=1 // pred_check_branch
      %91 = sbr.rel (0) target = $region29
    $region28: #{tpu_custom_call.1} parent=1 // pred_region
      %93 = dma.done [#allocation4], 128
    $region29: #{tpu_custom_call.1} parent=1 // pred_fallthru
      _
    %94 = vsyncpa [#allocation3], 1
    %95 = vsyncpa [#allocation6], 1
    %96 = vsyncpa [#allocation4], 1

</llo_original>
